<compile_context>
chip_gen: v5e
topology: v5e:2x2
jax: 0.10.0
libtpu: 0.0.40
codegen_flags: <defaults>
</compile_context>

<pallas_src>
import functools

import jax
import jax.numpy as jnp
from jax.experimental import pallas as pl
from jax.experimental.pallas import tpu as pltpu

# Cap the per-tile lane count so the static chunk-fold unroll stays small
# (<= 64 VPU folds per tile) regardless of how small C is.
_MAX_TILE_LANES = 8192


def _vmem_budget():
    """(target_tile_bytes, vmem_limit_bytes) gated by chip generation."""
    try:
        cap = pltpu.get_tpu_info().vmem_capacity_bytes
    except Exception:  # pragma: no cover - conservative fallback
        cap = 128 * 1024 * 1024
    if cap >= 96 * 1024 * 1024:          # v5e / v6e: 128 MiB physical VMEM
        return 8 * 1024 * 1024, 64 * 1024 * 1024
    # v7x: 64 MiB physical VMEM per TensorCore, but 3.2 TB/s HBM.
    return 4 * 1024 * 1024, 40 * 1024 * 1024


def _pick_tile_hw(hw_pad, c, itemsize, target_bytes):
    """Largest multiple-of-128 tile dividing hw_pad within the byte budget."""
    budget_lanes = max(128, target_bytes // max(1, c * itemsize))
    tile = min(hw_pad, (budget_lanes // 128) * 128, _MAX_TILE_LANES)
    tile = max(tile, 128)
    while hw_pad % tile != 0:            # terminates: 128 divides hw_pad
        tile -= 128
    return tile


def _tree_fold(vals, op):
    """Pairwise-tree combine of a list of same-shape arrays (VPU ops)."""
    vals = list(vals)
    while len(vals) > 1:
        nxt = [op(vals[i], vals[i + 1]) for i in range(0, len(vals) - 1, 2)]
        if len(vals) % 2:
            nxt.append(vals[-1])
        vals = nxt
    return vals[0]


def _cam_fused_kernel(q_ref, k_ref, w1t_ref, b1_ref, w2t_ref, b2_ref, o_ref,
                      max_acc, sum_acc, gate_acc, *, hw_valid, tile_hw, padded):
    # q_ref / k_ref / o_ref blocks: (C, tile_hw)   (leading batch dim squeezed)
    # max_acc / sum_acc: (C, 128) f32 scratch, gate_acc: (C, 1) in k dtype.
    p = pl.program_id(1)                 # phase: 0 = pool q, 1 = apply to k
    t = pl.program_id(2)                 # HW tile index
    nchunks = tile_hw // 128

    # ---------------- Phase 0: global max / sum pooling over q ----------------
    @pl.when(p == 0)
    def _pool_phase():
        @pl.when(t == 0)
        def _init():
            max_acc[...] = jnp.full_like(max_acc, -jnp.inf)
            sum_acc[...] = jnp.zeros_like(sum_acc)

        qf = q_ref[...].astype(jnp.float32)                      # (C, tile_hw)
        chunks = [qf[:, i * 128:(i + 1) * 128] for i in range(nchunks)]

        if padded:
            # Mask the zero-padded tail lanes: -inf for max, 0 for sum.
            lane = jax.lax.broadcasted_iota(jnp.int32, chunks[0].shape, 1)
            base = t * tile_hw
            max_chunks, sum_chunks = [], []
            for i, ch in enumerate(chunks):
                valid = (base + i * 128 + lane) < hw_valid
                max_chunks.append(jnp.where(valid, ch, -jnp.inf))
                sum_chunks.append(jnp.where(valid, ch, 0.0))
        else:
            max_chunks, sum_chunks = chunks, chunks

        # Elementwise VPU folds into (C, 128) accumulators; the cross-lane
        # XLU reduce happens once per batch in the epilogue below.
        max_acc[...] = jnp.maximum(max_acc[...], _tree_fold(max_chunks, jnp.maximum))
        sum_acc[...] = sum_acc[...] + _tree_fold(sum_chunks, jnp.add)

        @pl.when(t == pl.num_programs(2) - 1)
        def _gate():
            q_max = jnp.max(max_acc[...], axis=-1, keepdims=True)            # (C, 1)
            q_avg = jnp.sum(sum_acc[...], axis=-1, keepdims=True) * (1.0 / hw_valid)
            x = jnp.concatenate([q_max, q_avg], axis=1)                      # (C, 2)

            w1t = w1t_ref[...].astype(jnp.float32)                           # (R, C)
            b1 = b1_ref[...].astype(jnp.float32)                             # (R, 1)
            w2t = w2t_ref[...].astype(jnp.float32)                           # (C, R)
            b2 = b2_ref[...].astype(jnp.float32)                             # (C, 1)

            # Shared MLP applied to both pooled vectors with one pair of
            # matmuls (column orientation; bias broadcast over the 2 columns).
            h = jnp.maximum(jnp.dot(w1t, x, preferred_element_type=jnp.float32) + b1, 0.0)
            y = jnp.dot(w2t, h, preferred_element_type=jnp.float32) + b2     # (C, 2)
            cw = jnp.sum(y, axis=1, keepdims=True)                           # mlp(max)+mlp(avg)
            gate_acc[...] = jax.nn.sigmoid(cw).astype(o_ref.dtype)           # (C, 1)

    # ---------------- Phase 1: out = k * gate (broadcast over HW lanes) -------
    @pl.when(p == 1)
    def _apply_phase():
        o_ref[...] = k_ref[...] * gate_acc[...]


@functools.partial(jax.jit, static_argnames=("tile_hw",))
def cam_forward(q, k, w1, b1, w2, b2, *, tile_hw=None):
    """q, k: (B, C, H, W). w1: (C, R), b1: (R,), w2: (R, C), b2: (C,)."""
    B, C, H, W = q.shape
    HW = H * W
    itemsize = jnp.dtype(q.dtype).itemsize

    target_tile_bytes, vmem_cap = _vmem_budget()

    # Pad HW up to a multiple of 128 so every block is lane-dense and bounded.
    hw_pad = ((HW + 127) // 128) * 128
    padded = hw_pad != HW

    if tile_hw is None:
        tile_hw = _pick_tile_hw(hw_pad, C, itemsize, target_tile_bytes)
    assert tile_hw % 128 == 0 and hw_pad % tile_hw == 0, \
        "tile_hw must be a multiple of 128 that divides the padded H*W"
    num_t = hw_pad // tile_hw
    last_t = num_t - 1

    # Native layout: reshape only (plus a zero-pad copy only in the fallback
    # case HW % 128 != 0); no HBM transposes.
    q3 = q.reshape(B, C, HW)
    k3 = k.reshape(B, C, HW)
    if padded:
        pad = hw_pad - HW
        q3 = jnp.pad(q3, ((0, 0), (0, 0), (0, pad)))
        k3 = jnp.pad(k3, ((0, 0), (0, 0), (0, pad)))

    # Column-orientation parameters (no in-kernel weight transposes).
    w1t = jnp.transpose(w1)              # (R, C)
    w2t = jnp.transpose(w2)              # (C, R)
    b1c = b1.reshape(-1, 1)              # (R, 1)
    b2c = b2.reshape(-1, 1)              # (C, 1)

    tile_bytes = C * tile_hw * itemsize
    vmem_limit = int(min(vmem_cap, max(16 * 1024 * 1024, 8 * tile_bytes)))

    kernel = functools.partial(
        _cam_fused_kernel, hw_valid=HW, tile_hw=tile_hw, padded=padded)

    def param_spec(shape):
        # Constant index map -> fetched once; single buffer is enough.
        return pl.BlockSpec(shape, lambda b, p, t: (0, 0),
                            pipeline_mode=pl.Buffered(1))

    out3 = pl.pallas_call(
        kernel,
        out_shape=jax.ShapeDtypeStruct((B, C, hw_pad), k.dtype),
        grid_spec=pltpu.PrefetchScalarGridSpec(
            num_scalar_prefetch=0,
            grid=(B, 2, num_t),
            in_specs=[
                # q: stream tiles during phase 0; park on the last block in
                # phase 1 (same block index => no redundant DMA).
                pl.BlockSpec((None, C, tile_hw),
                             lambda b, p, t: (b, 0, t * (1 - p) + last_t * p)),
                # k: parked on block 0 during phase 0; stream tiles in phase 1.
                pl.BlockSpec((None, C, tile_hw),
                             lambda b, p, t: (b, 0, t * p)),
                param_spec(w1t.shape),   # W1^T
                param_spec(b1c.shape),   # b1
                param_spec(w2t.shape),   # W2^T
                param_spec(b2c.shape),   # b2
            ],
            out_specs=pl.BlockSpec((None, C, tile_hw),
                                   lambda b, p, t: (b, 0, t * p)),
            scratch_shapes=[
                pltpu.VMEM((C, 128), jnp.float32),   # running max (per-lane)
                pltpu.VMEM((C, 128), jnp.float32),   # running sum (per-lane)
                pltpu.VMEM((C, 1), k.dtype),         # sigmoid gate (k dtype)
            ],
        ),
        compiler_params=pltpu.CompilerParams(
            dimension_semantics=("parallel", "arbitrary", "arbitrary"),
            vmem_limit_bytes=vmem_limit),
    )(q3, k3, w1t, b1c, w2t, b2c)

    if padded:
        out3 = out3[:, :, :HW]
    return out3.reshape(B, C, H, W)


def _reference_cam(q, k, w1, b1, w2, b2):
    """Pure-JAX reference mirroring the PyTorch module."""
    B, C, H, W = q.shape
    q_max = jnp.max(q.reshape(B, C, -1), axis=-1)
    q_avg = jnp.mean(q.reshape(B, C, -1), axis=-1)

    def mlp(x):
        h = jnp.maximum(x @ w1 + b1, 0.0)
        return h @ w2 + b2

    cw = mlp(q_max) + mlp(q_avg)
    gate = jax.nn.sigmoid(cw)[:, :, None, None]
    return k * gate


if __name__ == "__main__":
    key = jax.random.PRNGKey(0)
    B, C, H, W = 2, 16, 16, 16          # in_channels=16, reduction_ratio=8 -> R=2
    reduction_ratio = 8
    R = C // reduction_ratio

    kq, kk, kw1, kb1, kw2, kb2 = jax.random.split(key, 6)
    q = jax.random.normal(kq, (B, C, H, W), dtype=jnp.float32)
    k = jax.random.normal(kk, (B, C, H, W), dtype=jnp.float32)

    # Linear weights stored pre-transposed: w1 is (in=C, out=R), w2 is
    # (in=R, out=C), so the reference computes y = x @ w + b.
    w1 = jax.random.normal(kw1, (C, R), dtype=jnp.float32) * 0.1
    b1 = jax.random.normal(kb1, (R,), dtype=jnp.float32) * 0.1
    w2 = jax.random.normal(kw2, (R, C), dtype=jnp.float32) * 0.1
    b2 = jax.random.normal(kb2, (C,), dtype=jnp.float32) * 0.1

    ref = _reference_cam(q, k, w1, b1, w2, b2)

    # Multi-tile path (HW=256 split into two lane-dense 128-lane tiles)
    # exercises running-max / running-sum accumulation across q tiles and the
    # phase-1 streamed apply.
    out_tiled = jax.block_until_ready(
        cam_forward(q, k, w1, b1, w2, b2, tile_hw=128))
    # Auto-picked tile (single 256-lane tile at this small shape).
    out_auto = jax.block_until_ready(cam_forward(q, k, w1, b1, w2, b2))

    assert out_tiled.shape == (B, C, H, W)
    assert jnp.allclose(out_tiled, ref, atol=1e-5, rtol=1e-5), "tiled mismatch"
    assert jnp.allclose(out_auto, ref, atol=1e-5, rtol=1e-5), "auto mismatch"

    # Padded fallback path: H*W = 144 is not a multiple of 128 -> padded to
    # 256; explicit tile_hw=128 exercises padding + masking + multi-tile
    # accumulation together.
    Hp = Wp = 12
    qp = jax.random.normal(kq, (B, C, Hp, Wp), dtype=jnp.float32)
    kp = jax.random.normal(kk, (B, C, Hp, Wp), dtype=jnp.float32)
    refp = _reference_cam(qp, kp, w1, b1, w2, b2)
    outp = jax.block_until_ready(
        cam_forward(qp, kp, w1, b1, w2, b2, tile_hw=128))
    assert jnp.allclose(outp, refp, atol=1e-5, rtol=1e-5), "padded mismatch"

    print("KERNEL_OK")
</pallas_src>

<mosaic_0001>
module attributes {stable_mosaic.version = 11 : i64} {
  func.func @_cam_fused_kernel(%arg0: i32, %arg1: i32, %arg2: i32, %arg3: memref<1x16x128xf32, #tpu.memory_space<vmem>>, %arg4: memref<1x16x128xf32, #tpu.memory_space<vmem>>, %arg5: memref<2x16xf32, #tpu.memory_space<vmem>>, %arg6: memref<2x1xf32, #tpu.memory_space<vmem>>, %arg7: memref<16x2xf32, #tpu.memory_space<vmem>>, %arg8: memref<16x1xf32, #tpu.memory_space<vmem>>, %arg9: memref<1x16x128xf32, #tpu.memory_space<vmem>>, %arg10: memref<16x128xf32, #tpu.memory_space<vmem>>, %arg11: memref<16x128xf32, #tpu.memory_space<vmem>>, %arg12: memref<16x1xf32, #tpu.memory_space<vmem>>) attributes {dimension_semantics = [#tpu.dimension_semantics<parallel>, #tpu.dimension_semantics<arbitrary>, #tpu.dimension_semantics<arbitrary>], iteration_bounds = array<i64: 2, 2, 2>, scalar_prefetch = 0 : i64, scratch_operands = 3 : i64, tpu.core_type = #tpu.core_type<tc>, window_params = [{transform_indices = @transform_0, window_bounds = array<i64: 1, 16, 128>}, {transform_indices = @transform_1, window_bounds = array<i64: 1, 16, 128>}, {pipeline_mode = #tpu.pipeline_mode<synchronous>, transform_indices = @transform_2, window_bounds = array<i64: 2, 16>}, {pipeline_mode = #tpu.pipeline_mode<synchronous>, transform_indices = @transform_3, window_bounds = array<i64: 2, 1>}, {pipeline_mode = #tpu.pipeline_mode<synchronous>, transform_indices = @transform_4, window_bounds = array<i64: 16, 2>}, {pipeline_mode = #tpu.pipeline_mode<synchronous>, transform_indices = @transform_5, window_bounds = array<i64: 16, 1>}, {transform_indices = @transform_6, window_bounds = array<i64: 1, 16, 128>}]} {
    %c0_i32 = arith.constant 0 : i32
    %0 = arith.cmpi eq, %arg1, %c0_i32 : i32
    %1 = arith.extui %0 : i1 to i32
    %c0_i32_0 = arith.constant 0 : i32
    %2 = arith.cmpi ne, %1, %c0_i32_0 : i32
    scf.if %2 {
      %c0_i32_2 = arith.constant 0 : i32
      %6 = arith.cmpi eq, %arg2, %c0_i32_2 : i32
      %7 = arith.extui %6 : i1 to i32
      %c0_i32_3 = arith.constant 0 : i32
      %8 = arith.cmpi ne, %7, %c0_i32_3 : i32
      scf.if %8 {
        %cst = arith.constant 0xFF800000 : f32
        %20 = vector.broadcast %cst : f32 to vector<16x128xf32>
        %c0_16 = arith.constant 0 : index
        %c0_17 = arith.constant 0 : index
        %21 = vector.load %arg10[%c0_16, %c0_17] : memref<16x128xf32, #tpu.memory_space<vmem>>, vector<16x128xf32>
        tpu.vector_store %arg10[%c0_16, %c0_17], %20 {strides = array<i32>} : memref<16x128xf32, #tpu.memory_space<vmem>>, vector<16x128xf32>,
        %cst_18 = arith.constant 0.000000e+00 : f32
        %22 = vector.broadcast %cst_18 : f32 to vector<16x128xf32>
        %c0_19 = arith.constant 0 : index
        %c0_20 = arith.constant 0 : index
        %23 = vector.load %arg11[%c0_19, %c0_20] : memref<16x128xf32, #tpu.memory_space<vmem>>, vector<16x128xf32>
        tpu.vector_store %arg11[%c0_19, %c0_20], %22 {strides = array<i32>} : memref<16x128xf32, #tpu.memory_space<vmem>>, vector<16x128xf32>,
      } else {
      }
      %c0 = arith.constant 0 : index
      %c0_4 = arith.constant 0 : index
      %c0_5 = arith.constant 0 : index
      %9 = vector.load %arg3[%c0, %c0_4, %c0_5] : memref<1x16x128xf32, #tpu.memory_space<vmem>>, vector<1x16x128xf32>
      %10 = vector.shape_cast %9 : vector<1x16x128xf32> to vector<16x128xf32>
      %c0_6 = arith.constant 0 : index
      %c0_7 = arith.constant 0 : index
      %11 = vector.load %arg10[%c0_6, %c0_7] : memref<16x128xf32, #tpu.memory_space<vmem>>, vector<16x128xf32>
      %12 = arith.maximumf %11, %10 : vector<16x128xf32>
      %c0_8 = arith.constant 0 : index
      %c0_9 = arith.constant 0 : index
      %13 = vector.load %arg10[%c0_8, %c0_9] : memref<16x128xf32, #tpu.memory_space<vmem>>, vector<16x128xf32>
      tpu.vector_store %arg10[%c0_8, %c0_9], %12 {strides = array<i32>} : memref<16x128xf32, #tpu.memory_space<vmem>>, vector<16x128xf32>,
      %c0_10 = arith.constant 0 : index
      %c0_11 = arith.constant 0 : index
      %14 = vector.load %arg11[%c0_10, %c0_11] : memref<16x128xf32, #tpu.memory_space<vmem>>, vector<16x128xf32>
      %15 = arith.addf %14, %10 : vector<16x128xf32>
      %c0_12 = arith.constant 0 : index
      %c0_13 = arith.constant 0 : index
      %16 = vector.load %arg11[%c0_12, %c0_13] : memref<16x128xf32, #tpu.memory_space<vmem>>, vector<16x128xf32>
      tpu.vector_store %arg11[%c0_12, %c0_13], %15 {strides = array<i32>} : memref<16x128xf32, #tpu.memory_space<vmem>>, vector<16x128xf32>,
      %c1_i32_14 = arith.constant 1 : i32
      %17 = arith.cmpi eq, %arg2, %c1_i32_14 : i32
      %18 = arith.extui %17 : i1 to i32
      %c0_i32_15 = arith.constant 0 : i32
      %19 = arith.cmpi ne, %18, %c0_i32_15 : i32
      scf.if %19 {
        %c0_16 = arith.constant 0 : index
        %c0_17 = arith.constant 0 : index
        %20 = vector.load %arg10[%c0_16, %c0_17] : memref<16x128xf32, #tpu.memory_space<vmem>>, vector<16x128xf32>
        %cst = arith.constant dense<0xFF800000> : vector<16xf32>
        %21 = vector.multi_reduction <maximumf>, %20, %cst [1] : vector<16x128xf32> to vector<16xf32>
        %22 = vector.shape_cast %21 : vector<16xf32> to vector<16x1xf32>
        %c0_18 = arith.constant 0 : index
        %c0_19 = arith.constant 0 : index
        %23 = vector.load %arg11[%c0_18, %c0_19] : memref<16x128xf32, #tpu.memory_space<vmem>>, vector<16x128xf32>
        %cst_20 = arith.constant dense<0.000000e+00> : vector<16xf32>
        %24 = vector.multi_reduction <add>, %23, %cst_20 [1] : vector<16x128xf32> to vector<16xf32>
        %25 = vector.shape_cast %24 : vector<16xf32> to vector<16x1xf32>
        %cst_21 = arith.constant 3.906250e-03 : f32
        %26 = vector.broadcast %cst_21 : f32 to vector<16x1xf32>
        %27 = arith.mulf %25, %26 : vector<16x1xf32>
        %28 = tpu.concatenate %22, %27 in 1 : vector<16x1xf32>, vector<16x1xf32> -> vector<16x2xf32>
        %c0_22 = arith.constant 0 : index
        %c0_23 = arith.constant 0 : index
        %29 = vector.load %arg5[%c0_22, %c0_23] : memref<2x16xf32, #tpu.memory_space<vmem>>, vector<2x16xf32>
        %c0_24 = arith.constant 0 : index
        %c0_25 = arith.constant 0 : index
        %30 = vector.load %arg6[%c0_24, %c0_25] : memref<2x1xf32, #tpu.memory_space<vmem>>, vector<2x1xf32>
        %c0_26 = arith.constant 0 : index
        %c0_27 = arith.constant 0 : index
        %31 = vector.load %arg7[%c0_26, %c0_27] : memref<16x2xf32, #tpu.memory_space<vmem>>, vector<16x2xf32>
        %c0_28 = arith.constant 0 : index
        %c0_29 = arith.constant 0 : index
        %32 = vector.load %arg8[%c0_28, %c0_29] : memref<16x1xf32, #tpu.memory_space<vmem>>, vector<16x1xf32>
        %cst_30 = arith.constant dense<0.000000e+00> : vector<2x2xf32>
        %33 = tpu.matmul %29, %28, %cst_30 {dimension_numbers = #tpu.dot_dimension_numbers<[1], [0], [0], [1], [0, 0, 1, 1], [], []>} : vector<2x16xf32>, vector<16x2xf32>, vector<2x2xf32> -> vector<2x2xf32>
        %34 = vector.broadcast %30 : vector<2x1xf32> to vector<2x2xf32>
        %35 = arith.addf %33, %34 : vector<2x2xf32>
        %cst_31 = arith.constant 0.000000e+00 : f32
        %36 = vector.broadcast %cst_31 : f32 to vector<2x2xf32>
        %37 = arith.maximumf %35, %36 : vector<2x2xf32>
        %cst_32 = arith.constant dense<0.000000e+00> : vector<16x2xf32>
        %38 = tpu.matmul %31, %37, %cst_32 {dimension_numbers = #tpu.dot_dimension_numbers<[1], [0], [0], [1], [0, 0, 1, 1], [], []>} : vector<16x2xf32>, vector<2x2xf32>, vector<16x2xf32> -> vector<16x2xf32>
        %39 = vector.broadcast %32 : vector<16x1xf32> to vector<16x2xf32>
        %40 = arith.addf %38, %39 : vector<16x2xf32>
        %cst_33 = arith.constant dense<0.000000e+00> : vector<16xf32>
        %41 = vector.multi_reduction <add>, %40, %cst_33 [1] : vector<16x2xf32> to vector<16xf32>
        %42 = vector.shape_cast %41 : vector<16xf32> to vector<16x1xf32>
        %43 = arith.negf %42 : vector<16x1xf32>
        %44 = math.exp %43 : vector<16x1xf32>
        %cst_34 = arith.constant 1.000000e+00 : f32
        %45 = vector.broadcast %cst_34 : f32 to vector<16x1xf32>
        %46 = arith.addf %45, %44 : vector<16x1xf32>
        %47 = arith.divf %45, %46 : vector<16x1xf32>
        %c0_35 = arith.constant 0 : index
        %c0_36 = arith.constant 0 : index
        %48 = vector.load %arg12[%c0_35, %c0_36] : memref<16x1xf32, #tpu.memory_space<vmem>>, vector<16x1xf32>
        tpu.vector_store %arg12[%c0_35, %c0_36], %47 {strides = array<i32>} : memref<16x1xf32, #tpu.memory_space<vmem>>, vector<16x1xf32>,
      } else {
      }
    } else {
    }
    %c1_i32 = arith.constant 1 : i32
    %3 = arith.cmpi eq, %arg1, %c1_i32 : i32
    %4 = arith.extui %3 : i1 to i32
    %c0_i32_1 = arith.constant 0 : i32
    %5 = arith.cmpi ne, %4, %c0_i32_1 : i32
    scf.if %5 {
      %c0 = arith.constant 0 : index
      %c0_2 = arith.constant 0 : index
      %c0_3 = arith.constant 0 : index
      %6 = vector.load %arg4[%c0, %c0_2, %c0_3] : memref<1x16x128xf32, #tpu.memory_space<vmem>>, vector<1x16x128xf32>
      %7 = vector.shape_cast %6 : vector<1x16x128xf32> to vector<16x128xf32>
      %c0_4 = arith.constant 0 : index
      %c0_5 = arith.constant 0 : index
      %8 = vector.load %arg12[%c0_4, %c0_5] : memref<16x1xf32, #tpu.memory_space<vmem>>, vector<16x1xf32>
      %9 = vector.broadcast %8 : vector<16x1xf32> to vector<16x128xf32>
      %10 = arith.mulf %7, %9 : vector<16x128xf32>
      %c0_6 = arith.constant 0 : index
      %c0_7 = arith.constant 0 : index
      %c0_8 = arith.constant 0 : index
      %11 = vector.load %arg9[%c0_6, %c0_7, %c0_8] : memref<1x16x128xf32, #tpu.memory_space<vmem>>, vector<1x16x128xf32>
      %12 = vector.shape_cast %11 : vector<1x16x128xf32> to vector<16x128xf32>
      %13 = vector.shape_cast %10 : vector<16x128xf32> to vector<1x16x128xf32>
      tpu.vector_store %arg9[%c0_6, %c0_7, %c0_8], %13 {strides = array<i32>} : memref<1x16x128xf32, #tpu.memory_space<vmem>>, vector<1x16x128xf32>,
    } else {
    }
    return
  }
  func.func @transform_0(%arg0: i32, %arg1: i32, %arg2: i32) -> (i32, i32, i32) {
    %c1_i32 = arith.constant 1 : i32
    %0 = arith.subi %c1_i32, %arg1 : i32
    %1 = arith.muli %arg2, %0 : i32
    %c1_i32_0 = arith.constant 1 : i32
    %2 = arith.muli %c1_i32_0, %arg1 : i32
    %3 = arith.addi %1, %2 : i32
    %c0_i32 = arith.constant 0 : i32
    %c0_i32_1 = arith.constant 0 : i32
    return %arg0, %c0_i32, %3 : i32, i32, i32
  }
  func.func @transform_1(%arg0: i32, %arg1: i32, %arg2: i32) -> (i32, i32, i32) {
    %0 = arith.muli %arg2, %arg1 : i32
    %c0_i32 = arith.constant 0 : i32
    %c0_i32_0 = arith.constant 0 : i32
    return %arg0, %c0_i32, %0 : i32, i32, i32
  }
  func.func @transform_2(%arg0: i32, %arg1: i32, %arg2: i32) -> (i32, i32) {
    %c0_i32 = arith.constant 0 : i32
    %c0_i32_0 = arith.constant 0 : i32
    %c0_i32_1 = arith.constant 0 : i32
    return %c0_i32, %c0_i32_0 : i32, i32
  }
  func.func @transform_3(%arg0: i32, %arg1: i32, %arg2: i32) -> (i32, i32) {
    %c0_i32 = arith.constant 0 : i32
    %c0_i32_0 = arith.constant 0 : i32
    %c0_i32_1 = arith.constant 0 : i32
    return %c0_i32, %c0_i32_0 : i32, i32
  }
  func.func @transform_4(%arg0: i32, %arg1: i32, %arg2: i32) -> (i32, i32) {
    %c0_i32 = arith.constant 0 : i32
    %c0_i32_0 = arith.constant 0 : i32
    %c0_i32_1 = arith.constant 0 : i32
    return %c0_i32, %c0_i32_0 : i32, i32
  }
  func.func @transform_5(%arg0: i32, %arg1: i32, %arg2: i32) -> (i32, i32) {
    %c0_i32 = arith.constant 0 : i32
    %c0_i32_0 = arith.constant 0 : i32
    %c0_i32_1 = arith.constant 0 : i32
    return %c0_i32, %c0_i32_0 : i32, i32
  }
  func.func @transform_6(%arg0: i32, %arg1: i32, %arg2: i32) -> (i32, i32, i32) {
    %0 = arith.muli %arg2, %arg1 : i32
    %c0_i32 = arith.constant 0 : i32
    %c0_i32_0 = arith.constant 0 : i32
    return %arg0, %c0_i32, %0 : i32, i32, i32
  }
}

</mosaic_0001>

<llo_original>
// kernel: cam_forward.1
$region0: #{cam_forward.1}
  #allocation0 [shape = 'u32[]', space=smem, size = 0x4, offset = 0x4, fixed_abs, tag = 'smem constant byte address 0x4 - core index']
  #allocation1 [shape = 'u32[72,128]{1,0:T(1,128)}', space=vmem, size = 0x9000, scoped, tag = 'internal scratch']
  #allocation2 [shape = 'f32[16,128]{1,0:T(8,128)}', space=vmem, size = 0x2000, scoped, tag = 'scratch operand']
  #allocation3 [shape = 'f32[16,128]{1,0:T(8,128)}', space=vmem, size = 0x2000, scoped, tag = 'scratch operand']
  #allocation4 [shape = 'f32[16,1]{1,0:T(8,128)}', space=vmem, size = 0x2000, scoped, tag = 'scratch operand']
  %s0 = inlined_call_operand.vmem [shape: f32[2,16,256], index: 0, kind: input, shape index: {}]
  %s1 = inlined_call_operand.vmem [shape: f32[2,16,256], index: 1, kind: input, shape index: {}]
  %s2 = inlined_call_operand.vmem [shape: f32[2,16], index: 2, kind: input, shape index: {}]
  %s3 = inlined_call_operand.vmem [shape: f32[2,1], index: 3, kind: input, shape index: {}]
  %s4 = inlined_call_operand.vmem [shape: f32[16,2], index: 4, kind: input, shape index: {}]
  %s5 = inlined_call_operand.vmem [shape: f32[16,1], index: 5, kind: input, shape index: {}]
  %s6 = inlined_call_operand.vmem [shape: f32[2,16,256], index: 6, kind: output, shape index: {}]
  %s7 = sld [smem:[#allocation0]]
  $region183: #{cam_forward.1} parent=0
    _
  %s9 = ssub.s32 1, %s7
  %s10 = scalar_select 0, %s9, %s7
  $region1: #{cam_forward.1} parent=0
    #allocation5 [shape = 'u8[16384]{0}', space=vmem, size = 0x4000, scoped, tag = 'input window, operand 0']
    #allocation6 [shape = 'u8[16384]{0}', space=vmem, size = 0x4000, scoped, tag = 'input window, operand 1']
    #allocation7 [shape = 'u8[16384]{0}', space=vmem, size = 0x4000, scoped, tag = 'output window, operand 0']
    loop: start=0, step=1, limit=10
    $region2: #{cam_forward.1} parent=1 // loop_pre_header
      _
    $region3: #{cam_forward.1} parent=1 // loop_header
      %s12 = sphi 0, %s16
      %p13 = scmp.ge.s32.totalorder %s12, 10
      %s19 = sphi 0, %s38
      %s20 = sphi 0, %s34
      %s21 = sphi 0, %s30
      %s22 = sphi 0, %s19
      %s23 = sphi 0, %s20
      %s24 = sphi 0, %s21
      %s25 = sphi 0, %s22
      %s26 = sphi 0, %s23
      %s27 = sphi 0, %s24
      %s49 = sphi 0, %s51
      %s52 = sphi 0, %s49
      %s53 = sphi 0, %s52
      %s69 = sphi 0, %s53
      %s79 = sphi 0, %s81
      %s82 = sphi 0, %s79
      %s83 = sphi 0, %s82
      %s99 = sphi 0, %s83
      %s103 = sphi 0, %s103
      %s105 = sphi 0, %s103
      %s106 = sphi 0, %s105
      %s120 = sphi 0, %s106
      %s124 = sphi 0, %s124
      %s126 = sphi 0, %s124
      %s127 = sphi 0, %s126
      %s141 = sphi 0, %s127
      %s145 = sphi 0, %s145
      %s147 = sphi 0, %s145
      %s148 = sphi 0, %s147
      %s162 = sphi 0, %s148
      %s166 = sphi 0, %s166
      %s168 = sphi 0, %s166
      %s169 = sphi 0, %s168
      %s183 = sphi 0, %s169
      %s193 = sphi 0, %s195
      %s196 = sphi 0, %s193
      %s197 = sphi 0, %s196
      %s213 = sphi 0, %s197
    $region4: #{cam_forward.1} parent=1 // loop_header_branch
      %15 = sbr.rel (%p13) target = $region8
    $region5: #{cam_forward.1} parent=1 // loop_body
      %s17 = ssub.s32 %s12, 1
      %s18 = ssub.s32 %s12, 2
      %s28 = sadd.s32 1, %s21
      %p29 = scmp.ge.s32.totalorder %s28, 2
      %s30 = scalar_select %p29, 0, %s28
      %s31 = sadd.s32 1, %s20
      %s32 = scalar_select %p29, %s31, %s20
      %p33 = scmp.ge.s32.totalorder %s32, 2
      %s34 = scalar_select %p33, 0, %s32
      %s35 = sadd.s32 1, %s19
      %s36 = scalar_select %p33, %s35, %s19
      %p37 = scmp.ge.s32.totalorder %s36, 2
      %s38 = scalar_select %p37, 0, %s36
      %s39 = ssub.s32 1, %s20
      %s40 = smul.u32 %s21, %s39
      %s41 = sadd.s32 %s40, %s20
      %s42 = ssub.s32 1, %s34
      %s43 = smul.u32 %s30, %s42
      %s44 = sadd.s32 %s43, %s34
      %s45 = ssub.s32 %s19, %s38
      %s46 = ssub.s32 %s41, %s44
      %s47 = sor.u32 %s45, %s46
      %p48 = scmp.eq.s32.totalorder %s47, 0
      %s50 = sadd.s32 %s49, 1
      %s51 = scalar_select %p48, %s49, %s50
      %p54 = pneg %p48
      %p55 = scmp.eq.s32.totalorder %s12, 7
      %p56 = por %p54, %p55
      %p57 = scmp.ne.s32.totalorder %s49, %s52
      %p58 = scmp.eq.s32.totalorder %s12, 0
      %p59 = por %p57, %p58
      %p60 = scmp.ne.s32.totalorder %s49, %s52
      %p61 = scmp.eq.s32.totalorder %s17, 7
      %p62 = por %p60, %p61
      %p63 = scmp.ne.s32.totalorder %s52, %s53
      %p64 = scmp.eq.s32.totalorder %s17, 0
      %p65 = por %p63, %p64
      %p66 = scmp.ne.s32.totalorder %s52, %s53
      %p67 = scmp.eq.s32.totalorder %s18, 7
      %p68 = por %p66, %p67
      %p70 = scmp.ne.s32.totalorder %s53, %s69
      %p71 = scmp.eq.s32.totalorder %s18, 0
      %p72 = por %p70, %p71
      %s73 = smul.u32 %s21, %s20
      %s74 = smul.u32 %s30, %s34
      %s75 = ssub.s32 %s19, %s38
      %s76 = ssub.s32 %s73, %s74
      %s77 = sor.u32 %s75, %s76
      %p78 = scmp.eq.s32.totalorder %s77, 0
      %s80 = sadd.s32 %s79, 1
      %s81 = scalar_select %p78, %s79, %s80
      %p84 = pneg %p78
      %p85 = scmp.eq.s32.totalorder %s12, 7
      %p86 = por %p84, %p85
      %p87 = scmp.ne.s32.totalorder %s79, %s82
      %p88 = scmp.eq.s32.totalorder %s12, 0
      %p89 = por %p87, %p88
      %p90 = scmp.ne.s32.totalorder %s79, %s82
      %p91 = scmp.eq.s32.totalorder %s17, 7
      %p92 = por %p90, %p91
      %p93 = scmp.ne.s32.totalorder %s82, %s83
      %p94 = scmp.eq.s32.totalorder %s17, 0
      %p95 = por %p93, %p94
      %p96 = scmp.ne.s32.totalorder %s82, %s83
      %p97 = scmp.eq.s32.totalorder %s18, 7
      %p98 = por %p96, %p97
      %p100 = scmp.ne.s32.totalorder %s83, %s99
      %p101 = scmp.eq.s32.totalorder %s18, 0
      %p102 = por %p100, %p101
      %s104 = sadd.s32 %s103, 1
      %p107 = scmp.eq.s32.totalorder %s12, 7
      %p108 = scmp.ne.s32.totalorder %s103, %s105
      %p109 = scmp.eq.s32.totalorder %s12, 0
      %p110 = por %p108, %p109
      %p111 = scmp.ne.s32.totalorder %s103, %s105
      %p112 = scmp.eq.s32.totalorder %s17, 7
      %p113 = por %p111, %p112
      %p114 = scmp.ne.s32.totalorder %s105, %s106
      %p115 = scmp.eq.s32.totalorder %s17, 0
      %p116 = por %p114, %p115
      %p117 = scmp.ne.s32.totalorder %s105, %s106
      %p118 = scmp.eq.s32.totalorder %s18, 7
      %p119 = por %p117, %p118
      %p121 = scmp.ne.s32.totalorder %s106, %s120
      %p122 = scmp.eq.s32.totalorder %s18, 0
      %p123 = por %p121, %p122
      %s125 = sadd.s32 %s124, 1
      %p128 = scmp.eq.s32.totalorder %s12, 7
      %p129 = scmp.ne.s32.totalorder %s124, %s126
      %p130 = scmp.eq.s32.totalorder %s12, 0
      %p131 = por %p129, %p130
      %p132 = scmp.ne.s32.totalorder %s124, %s126
      %p133 = scmp.eq.s32.totalorder %s17, 7
      %p134 = por %p132, %p133
      %p135 = scmp.ne.s32.totalorder %s126, %s127
      %p136 = scmp.eq.s32.totalorder %s17, 0
      %p137 = por %p135, %p136
      %p138 = scmp.ne.s32.totalorder %s126, %s127
      %p139 = scmp.eq.s32.totalorder %s18, 7
      %p140 = por %p138, %p139
      %p142 = scmp.ne.s32.totalorder %s127, %s141
      %p143 = scmp.eq.s32.totalorder %s18, 0
      %p144 = por %p142, %p143
      %s146 = sadd.s32 %s145, 1
      %p149 = scmp.eq.s32.totalorder %s12, 7
      %p150 = scmp.ne.s32.totalorder %s145, %s147
      %p151 = scmp.eq.s32.totalorder %s12, 0
      %p152 = por %p150, %p151
      %p153 = scmp.ne.s32.totalorder %s145, %s147
      %p154 = scmp.eq.s32.totalorder %s17, 7
      %p155 = por %p153, %p154
      %p156 = scmp.ne.s32.totalorder %s147, %s148
      %p157 = scmp.eq.s32.totalorder %s17, 0
      %p158 = por %p156, %p157
      %p159 = scmp.ne.s32.totalorder %s147, %s148
      %p160 = scmp.eq.s32.totalorder %s18, 7
      %p161 = por %p159, %p160
      %p163 = scmp.ne.s32.totalorder %s148, %s162
      %p164 = scmp.eq.s32.totalorder %s18, 0
      %p165 = por %p163, %p164
      %s167 = sadd.s32 %s166, 1
      %p170 = scmp.eq.s32.totalorder %s12, 7
      %p171 = scmp.ne.s32.totalorder %s166, %s168
      %p172 = scmp.eq.s32.totalorder %s12, 0
      %p173 = por %p171, %p172
      %p174 = scmp.ne.s32.totalorder %s166, %s168
      %p175 = scmp.eq.s32.totalorder %s17, 7
      %p176 = por %p174, %p175
      %p177 = scmp.ne.s32.totalorder %s168, %s169
      %p178 = scmp.eq.s32.totalorder %s17, 0
      %p179 = por %p177, %p178
      %p180 = scmp.ne.s32.totalorder %s168, %s169
      %p181 = scmp.eq.s32.totalorder %s18, 7
      %p182 = por %p180, %p181
      %p184 = scmp.ne.s32.totalorder %s169, %s183
      %p185 = scmp.eq.s32.totalorder %s18, 0
      %p186 = por %p184, %p185
      %s187 = smul.u32 %s21, %s20
      %s188 = smul.u32 %s30, %s34
      %s189 = ssub.s32 %s19, %s38
      %s190 = ssub.s32 %s187, %s188
      %s191 = sor.u32 %s189, %s190
      %p192 = scmp.eq.s32.totalorder %s191, 0
      %s194 = sadd.s32 %s193, 1
      %s195 = scalar_select %p192, %s193, %s194
      %p198 = pneg %p192
      %p199 = scmp.eq.s32.totalorder %s12, 7
      %p200 = por %p198, %p199
      %p201 = scmp.ne.s32.totalorder %s193, %s196
      %p202 = scmp.eq.s32.totalorder %s12, 0
      %p203 = por %p201, %p202
      %p204 = scmp.ne.s32.totalorder %s193, %s196
      %p205 = scmp.eq.s32.totalorder %s17, 7
      %p206 = por %p204, %p205
      %p207 = scmp.ne.s32.totalorder %s196, %s197
      %p208 = scmp.eq.s32.totalorder %s17, 0
      %p209 = por %p207, %p208
      %p210 = scmp.ne.s32.totalorder %s196, %s197
      %p211 = scmp.eq.s32.totalorder %s18, 7
      %p212 = por %p210, %p211
      %p214 = scmp.ne.s32.totalorder %s197, %s213
      %p215 = scmp.eq.s32.totalorder %s18, 0
      %p216 = por %p214, %p215
      %p217 = scmp.le.s32.totalorder 1, %s12
      %p218 = scmp.lt.s32.totalorder %s12, 9
      %p219 = pnand %p217, %p218
      %p220 = pneg %p219
      // Predicated region
      $region9: #{cam_forward.1} parent=5 // pred_check
        _
      $region10: #{cam_forward.1} parent=5 // pred_check_branch
        %222 = sbr.rel (%p219) target = $region12
      $region11: #{cam_forward.1} parent=5 // pred_region
        %s223 = ssub.s32 %s12, 1
        // Predicated region
        $region13: #{cam_forward.1} parent=11 // pred_check
          %p224 = pneg %p116
        $region14: #{cam_forward.1} parent=11 // pred_check_branch
          %226 = sbr.rel (%p224) target = $region16
        $region15: #{cam_forward.1} parent=11 // pred_region
          _
        $region16: #{cam_forward.1} parent=11 // pred_fallthru
          _
        // Predicated region
        $region17: #{cam_forward.1} parent=11 // pred_check
          %p227 = pneg %p137
        $region18: #{cam_forward.1} parent=11 // pred_check_branch
          %229 = sbr.rel (%p227) target = $region20
        $region19: #{cam_forward.1} parent=11 // pred_region
          _
        $region20: #{cam_forward.1} parent=11 // pred_fallthru
          _
        // Predicated region
        $region21: #{cam_forward.1} parent=11 // pred_check
          %p230 = pneg %p158
        $region22: #{cam_forward.1} parent=11 // pred_check_branch
          %232 = sbr.rel (%p230) target = $region24
        $region23: #{cam_forward.1} parent=11 // pred_region
          _
        $region24: #{cam_forward.1} parent=11 // pred_fallthru
          _
        // Predicated region
        $region25: #{cam_forward.1} parent=11 // pred_check
          %p233 = pneg %p179
        $region26: #{cam_forward.1} parent=11 // pred_check_branch
          %235 = sbr.rel (%p233) target = $region28
        $region27: #{cam_forward.1} parent=11 // pred_region
          _
        $region28: #{cam_forward.1} parent=11 // pred_fallthru
          _
      $region12: #{cam_forward.1} parent=5 // pred_fallthru
        _
      %p236 = scmp.lt.s32.totalorder %s12, 8
      // Predicated region
      $region29: #{cam_forward.1} parent=5 // pred_check
        %p237 = pneg %p236
      $region30: #{cam_forward.1} parent=5 // pred_check_branch
        %239 = sbr.rel (%p237) target = $region32
      $region31: #{cam_forward.1} parent=5 // pred_region
        // Predicated region
        $region33: #{cam_forward.1} parent=31 // pred_check
          %p240 = pneg %p59
        $region34: #{cam_forward.1} parent=31 // pred_check_branch
          %242 = sbr.rel (%p240) target = $region36
        $region35: #{cam_forward.1} parent=31 // pred_region
          %s243 = sand.u32 %s49, 1
          %s244 = sand.u32 %s49, 1
          %s245 = smul.addr %s244, 16
          %s246 = scalar_lea.vmem [#allocation5], %s245
          %s247 = ssub.s32 1, %s20
          %s248 = smul.u32 %s21, %s247
          %s249 = sadd.s32 %s248, %s20
          %s250 = smul.addr %s19, 4
          %s251 = sadd.s32 %s249, %s250
          %s252 = smul.addr %s251, 8
          %s253 = scalar_lea.vmem %s0, %s252
          // Predicated region
          $region37: #{cam_forward.1} parent=35 // pred_check
            _
          $region38: #{cam_forward.1} parent=35 // pred_check_branch
            %255 = sbr.rel (0) target = $region40
          $region39: #{cam_forward.1} parent=35 // pred_region
            // Predicated region
            $region41: #{cam_forward.1} parent=39 // pred_check
              _
            $region42: #{cam_forward.1} parent=39 // pred_check_branch
              %257 = sbr.rel (0) target = $region44
            $region43: #{cam_forward.1} parent=39 // pred_region
              // Predicated region
              $region56: #{cam_forward.1} parent=43 // pred_check
                _
              $region57: #{cam_forward.1} parent=43 // pred_check_branch
                %275 = sbr.rel (0) target = $region59
              $region58: #{cam_forward.1} parent=43 // pred_region
                loop: start=0, step=1, limit=1
                $region60: #{cam_forward.1} parent=58 // loop_pre_header
                  _
                $region61: #{cam_forward.1} parent=58 // loop_header
                  %s277 = sphi 0, %s281
                  %p278 = scmp.ge.s32.totalorder %s277, 1
                  %s282 = sphi %s253, %s253
                  %s283 = sphi %s246, %s246
                $region62: #{cam_forward.1} parent=58 // loop_header_branch
                  %280 = sbr.rel (%p278) target = $region66
                $region63: #{cam_forward.1} parent=58 // loop_body
                  %v284 = vld [vmem:[%s282] sm:$0xff]
                  %285 = vst [vmem:[%s283] sm:$0xff] %v284
                  %v286 = vld [vmem:[%s282 + $0x10] sm:$0xff]
                  %287 = vst [vmem:[%s283 + $0x8] sm:$0xff] %v286
                $region64: #{cam_forward.1} parent=58 // loop_footer
                  %s281 = sadd.s32 1, %s277
                $region65: #{cam_forward.1} parent=58 // loop_footer_branch
                  %276 = sbr.rel target = $region61
                $region66: #{cam_forward.1} parent=58 // loop_exit
                  _
              $region59: #{cam_forward.1} parent=43 // pred_fallthru
                _
              // Predicated region
              $region67: #{cam_forward.1} parent=43 // pred_check
                _
              $region68: #{cam_forward.1} parent=43 // pred_check_branch
                %289 = sbr.rel target = $region70
              $region69: #{cam_forward.1} parent=43 // pred_region
                _
              $region70: #{cam_forward.1} parent=43 // pred_fallthru
                _
            $region44: #{cam_forward.1} parent=39 // pred_fallthru
              _
            // Predicated region
            $region45: #{cam_forward.1} parent=39 // pred_check
              _
            $region46: #{cam_forward.1} parent=39 // pred_check_branch
              %259 = sbr.rel target = $region48
            $region47: #{cam_forward.1} parent=39 // pred_region
              %s261 = ssub.s32 256, 1
              loop: start=0, step=1, limit=1
              $region49: #{cam_forward.1} parent=47 // loop_pre_header
                _
              $region50: #{cam_forward.1} parent=47 // loop_header
                %s263 = sphi 0, %s267
                %p264 = scmp.ge.s32.totalorder %s263, 1
                %s268 = sphi %s253, %s253
                %s269 = sphi %s246, %s246
              $region51: #{cam_forward.1} parent=47 // loop_header_branch
                %266 = sbr.rel (%p264) target = $region55
              $region52: #{cam_forward.1} parent=47 // loop_body
                %v270 = vld [vmem:[%s268] sm:%s261]
                %271 = vst [vmem:[%s269] sm:%s261] %v270
                %v272 = vld [vmem:[%s268 + $0x10] sm:%s261]
                %273 = vst [vmem:[%s269 + $0x8] sm:%s261] %v272
              $region53: #{cam_forward.1} parent=47 // loop_footer
                %s267 = sadd.s32 1, %s263
              $region54: #{cam_forward.1} parent=47 // loop_footer_branch
                %262 = sbr.rel target = $region50
              $region55: #{cam_forward.1} parent=47 // loop_exit
                _
            $region48: #{cam_forward.1} parent=39 // pred_fallthru
              _
          $region40: #{cam_forward.1} parent=35 // pred_fallthru
            _
          %290 = vnop
        $region36: #{cam_forward.1} parent=31 // pred_fallthru
          _
        // Predicated region
        $region71: #{cam_forward.1} parent=31 // pred_check
          %p291 = pneg %p89
        $region72: #{cam_forward.1} parent=31 // pred_check_branch
          %293 = sbr.rel (%p291) target = $region74
        $region73: #{cam_forward.1} parent=31 // pred_region
          %s294 = sand.u32 %s79, 1
          %s295 = sand.u32 %s79, 1
          %s296 = smul.addr %s295, 16
          %s297 = scalar_lea.vmem [#allocation6], %s296
          %s298 = smul.u32 %s21, %s20
          %s299 = smul.addr %s19, 4
          %s300 = sadd.s32 %s298, %s299
          %s301 = smul.addr %s300, 8
          %s302 = scalar_lea.vmem %s1, %s301
          // Predicated region
          $region75: #{cam_forward.1} parent=73 // pred_check
            _
          $region76: #{cam_forward.1} parent=73 // pred_check_branch
            %304 = sbr.rel (0) target = $region78
          $region77: #{cam_forward.1} parent=73 // pred_region
            // Predicated region
            $region79: #{cam_forward.1} parent=77 // pred_check
              _
            $region80: #{cam_forward.1} parent=77 // pred_check_branch
              %306 = sbr.rel (0) target = $region82
            $region81: #{cam_forward.1} parent=77 // pred_region
              // Predicated region
              $region94: #{cam_forward.1} parent=81 // pred_check
                _
              $region95: #{cam_forward.1} parent=81 // pred_check_branch
                %324 = sbr.rel (0) target = $region97
              $region96: #{cam_forward.1} parent=81 // pred_region
                loop: start=0, step=1, limit=1
                $region98: #{cam_forward.1} parent=96 // loop_pre_header
                  _
                $region99: #{cam_forward.1} parent=96 // loop_header
                  %s326 = sphi 0, %s330
                  %p327 = scmp.ge.s32.totalorder %s326, 1
                  %s331 = sphi %s302, %s302
                  %s332 = sphi %s297, %s297
                $region100: #{cam_forward.1} parent=96 // loop_header_branch
                  %329 = sbr.rel (%p327) target = $region104
                $region101: #{cam_forward.1} parent=96 // loop_body
                  %v333 = vld [vmem:[%s331] sm:$0xff]
                  %334 = vst [vmem:[%s332] sm:$0xff] %v333
                  %v335 = vld [vmem:[%s331 + $0x10] sm:$0xff]
                  %336 = vst [vmem:[%s332 + $0x8] sm:$0xff] %v335
                $region102: #{cam_forward.1} parent=96 // loop_footer
                  %s330 = sadd.s32 1, %s326
                $region103: #{cam_forward.1} parent=96 // loop_footer_branch
                  %325 = sbr.rel target = $region99
                $region104: #{cam_forward.1} parent=96 // loop_exit
                  _
              $region97: #{cam_forward.1} parent=81 // pred_fallthru
                _
              // Predicated region
              $region105: #{cam_forward.1} parent=81 // pred_check
                _
              $region106: #{cam_forward.1} parent=81 // pred_check_branch
                %338 = sbr.rel target = $region108
              $region107: #{cam_forward.1} parent=81 // pred_region
                _
              $region108: #{cam_forward.1} parent=81 // pred_fallthru
                _
            $region82: #{cam_forward.1} parent=77 // pred_fallthru
              _
            // Predicated region
            $region83: #{cam_forward.1} parent=77 // pred_check
              _
            $region84: #{cam_forward.1} parent=77 // pred_check_branch
              %308 = sbr.rel target = $region86
            $region85: #{cam_forward.1} parent=77 // pred_region
              %s310 = ssub.s32 256, 1
              loop: start=0, step=1, limit=1
              $region87: #{cam_forward.1} parent=85 // loop_pre_header
                _
              $region88: #{cam_forward.1} parent=85 // loop_header
                %s312 = sphi 0, %s316
                %p313 = scmp.ge.s32.totalorder %s312, 1
                %s317 = sphi %s302, %s302
                %s318 = sphi %s297, %s297
              $region89: #{cam_forward.1} parent=85 // loop_header_branch
                %315 = sbr.rel (%p313) target = $region93
              $region90: #{cam_forward.1} parent=85 // loop_body
                %v319 = vld [vmem:[%s317] sm:%s310]
                %320 = vst [vmem:[%s318] sm:%s310] %v319
                %v321 = vld [vmem:[%s317 + $0x10] sm:%s310]
                %322 = vst [vmem:[%s318 + $0x8] sm:%s310] %v321
              $region91: #{cam_forward.1} parent=85 // loop_footer
                %s316 = sadd.s32 1, %s312
              $region92: #{cam_forward.1} parent=85 // loop_footer_branch
                %311 = sbr.rel target = $region88
              $region93: #{cam_forward.1} parent=85 // loop_exit
                _
            $region86: #{cam_forward.1} parent=77 // pred_fallthru
              _
          $region78: #{cam_forward.1} parent=73 // pred_fallthru
            _
          %339 = vnop
        $region74: #{cam_forward.1} parent=31 // pred_fallthru
          _
      $region32: #{cam_forward.1} parent=5 // pred_fallthru
        _
      %p340 = scmp.le.s32.totalorder 1, %s12
      %p341 = scmp.lt.s32.totalorder %s12, 9
      %p342 = pnand %p340, %p341
      %p343 = pneg %p342
      // Predicated region
      $region109: #{cam_forward.1} parent=5 // pred_check
        _
      $region110: #{cam_forward.1} parent=5 // pred_check_branch
        %345 = sbr.rel (%p342) target = $region112
      $region111: #{cam_forward.1} parent=5 // pred_region
        %s346 = ssub.s32 %s12, 1
        %s347 = sand.u32 %s52, 1
        %s348 = sand.u32 %s52, 1
        %s349 = smul.addr %s348, 16
        %s350 = scalar_lea.vmem [#allocation5], %s349
        // Predicated region
        $region113: #{cam_forward.1} parent=111 // pred_check
          %p351 = pneg %p65
        $region114: #{cam_forward.1} parent=111 // pred_check_branch
          %353 = sbr.rel (%p351) target = $region116
        $region115: #{cam_forward.1} parent=111 // pred_region
          _
        $region116: #{cam_forward.1} parent=111 // pred_fallthru
          _
        %s354 = sand.u32 %s82, 1
        %s355 = sand.u32 %s82, 1
        %s356 = smul.addr %s355, 16
        %s357 = scalar_lea.vmem [#allocation6], %s356
        // Predicated region
        $region117: #{cam_forward.1} parent=111 // pred_check
          %p358 = pneg %p95
        $region118: #{cam_forward.1} parent=111 // pred_check_branch
          %360 = sbr.rel (%p358) target = $region120
        $region119: #{cam_forward.1} parent=111 // pred_region
          _
        $region120: #{cam_forward.1} parent=111 // pred_fallthru
          _
        %s361 = sand.u32 %s52, 1
        %s362 = sand.u32 %s52, 1
        %s363 = smul.addr %s362, 16
        %s364 = scalar_lea.vmem [#allocation5], %s363
        %p365 = pneg %p65
        %p366 = pneg %p62
        %s367 = sand.u32 %s82, 1
        %s368 = sand.u32 %s82, 1
        %s369 = smul.addr %s368, 16
        %s370 = scalar_lea.vmem [#allocation6], %s369
        %p371 = pneg %p95
        %p372 = pneg %p92
        %p373 = pneg %p116
        %p374 = pneg %p113
        %p375 = pneg %p137
        %p376 = pneg %p134
        %p377 = pneg %p158
        %p378 = pneg %p155
        %p379 = pneg %p179
        %p380 = pneg %p176
        %p381 = pneg %p209
        %p382 = pneg %p206
        %s383 = sand.u32 %s196, 1
        %s384 = sand.u32 %s196, 1
        %s385 = smul.addr %s384, 16
        %s386 = scalar_lea.vmem [#allocation7], %s385
        %s387 = ssub.s32 1, %s23
        %s388 = smul.u32 %s24, %s387
        %s389 = sadd.s32 %s388, %s23
        %s390 = smul.u32 %s24, %s23
        %s391 = smul.u32 %s24, %s23
        %p392 = scmp.eq.s32.totalorder %s23, 0
        // Predicated region
        $region121: #{cam_forward.1} parent=111 // pred_check
          %p393 = pneg %p392
        $region122: #{cam_forward.1} parent=111 // pred_check_branch
          %395 = sbr.rel (%p393) target = $region124
        $region123: #{cam_forward.1} parent=111 // pred_region
          %p396 = scmp.eq.s32.totalorder %s24, 0
          // Predicated region
          $region125: #{cam_forward.1} parent=123 // pred_check
            %p397 = pneg %p396
          $region126: #{cam_forward.1} parent=123 // pred_check_branch
            %399 = sbr.rel (%p397) target = $region128
          $region127: #{cam_forward.1} parent=123 // pred_region
            %400 = vst [vmem:[#allocation2] sm:$0xff] -inf
            %401 = vst [vmem:[#allocation2 + $0x8] sm:$0xff] -inf
            %402 = vst [vmem:[#allocation3] sm:$0xff] 0.0
            %403 = vst [vmem:[#allocation3 + $0x8] sm:$0xff] 0.0
          $region128: #{cam_forward.1} parent=123 // pred_fallthru
            _
          %v404 = vld [vmem:[%s350] sm:$0xff]
          %v405 = vld [vmem:[%s350 + $0x8] sm:$0xff]
          %v406 = vld [vmem:[#allocation2] sm:$0xff]
          %v407 = vld [vmem:[#allocation2 + $0x8] sm:$0xff]
          %v408 = vmax.f32 %v406, %v404
          %v409 = vmax.f32 %v407, %v405
          %410 = vst [vmem:[#allocation2] sm:$0xff] %v408
          %411 = vst [vmem:[#allocation2 + $0x8] sm:$0xff] %v409
          %v412 = vld [vmem:[#allocation3] sm:$0xff]
          %v413 = vld [vmem:[#allocation3 + $0x8] sm:$0xff]
          %v414 = vadd.f32 %v412, %v404
          %v415 = vadd.f32 %v413, %v405
          %416 = vst [vmem:[#allocation3] sm:$0xff] %v414
          %417 = vst [vmem:[#allocation3 + $0x8] sm:$0xff] %v415
          %p418 = scmp.eq.s32.totalorder %s24, 1
          // Predicated region
          $region129: #{cam_forward.1} parent=123 // pred_check
            %p419 = pneg %p418
          $region130: #{cam_forward.1} parent=123 // pred_check_branch
            %421 = sbr.rel (%p419) target = $region132
          $region131: #{cam_forward.1} parent=123 // pred_region
            %v422 = vld [vmem:[#allocation2] sm:$0xff]
            %v423 = vld [vmem:[#allocation2 + $0x8] sm:$0xff]
            %424 = vmax.xlane.f32.xlu0 %v422
            %v425 = vpop.xlane.xlu0 %424
            %426 = vmax.xlane.f32.xlu0 %v423
            %v427 = vpop.xlane.xlu0 %426
            %v428 = vld [vmem:[#allocation3] sm:$0xff]
            %v429 = vld [vmem:[#allocation3 + $0x8] sm:$0xff]
            %430 = vadd.xlane.f32.xlu0 %v428
            %v431 = vpop.xlane.xlu0 %430
            %432 = vadd.xlane.f32.xlu0 %v429
            %v433 = vpop.xlane.xlu0 %432
            %v434 = vmul.f32 %v431, 0.00390625
            %v435 = vmul.f32 %v433, 0.00390625
            %vm436 = vcmask 7168
            %v437 = vsel %vm436, %v425, %v434
            %v438 = vsel %vm436, %v427, %v435
            %v439 = vld [vmem:[%s2] sm:$0x3]
            %v440 = vld [vmem:[%s3] sm:$0x3]
            %v441 = vld [vmem:[%s4] sm:$0xff]
            %v442 = vld [vmem:[%s4 + $0x8] sm:$0xff]
            %v443 = vld [vmem:[%s5] sm:$0xff]
            %v444 = vld [vmem:[%s5 + $0x8] sm:$0xff]
            %446 = vset.pattern.permute.xlu0 0
            %447 = vperm.xlu0 %446, %v440
            %v448 = vpop.permute.xlu0 %447
            %vm450 = vcmask 130048
            %v452 = vsel %vm450, %v439, 0
            %454 = vmatpush.msra.mxu0 0.0
            %455 = vmatpush.msra.mxu0 0.0
            %456 = vmatpush.msra.mxu0 0.0
            %457 = vmatpush.msra.mxu0 0.0
            %458 = vmatpush.msra.mxu0 0.0
            %459 = vmatpush.msra.mxu0 0.0
            %460 = vmatpush.msra.mxu0 0.0
            %461 = vmatpush.msra.mxu0 0.0
            %462 = vmatpush.msra.mxu0 0.0
            %463 = vmatpush.msra.mxu0 0.0
            %464 = vmatpush.msra.mxu0 0.0
            %465 = vmatpush.msra.mxu0 0.0
            %466 = vmatpush.msra.mxu0 0.0
            %467 = vmatpush.msra.mxu0 0.0
            %468 = vmatpush.msra.mxu0 %v438
            %469 = vmatpush.msra.mxu0 %v437
            %470 = vmatmul.f32.gmra.mxu0 %v452
            %v471 = vpop.f32.mrf.mxu0
            %v472 = vadd.f32 %v448, %v471
            %473 = vdwg.mxu0
            %v474 = vmax.f32 %v472, 0.0
            %476 = vset.pattern.permute.xlu0 0
            %477 = vperm.xlu0 %476, %v443
            %v478 = vpop.permute.xlu0 %477
            %481 = vset.pattern.permute.xlu0 0
            %482 = vperm.xlu0 %481, %v444
            %v483 = vpop.permute.xlu0 %482
            %vm485 = vcmask 15360
            %v487 = vsel %vm485, %v441, 0
            %v490 = vsel %vm485, %v442, 0
            %vm492 = vcmask 1041408
            %v494 = vsel %vm492, %v474, 0
            %496 = vmatpush.msra.mxu0 0.0
            %497 = vmatpush.msra.mxu0 0.0
            %498 = vmatpush.msra.mxu0 0.0
            %499 = vmatpush.msra.mxu0 0.0
            %500 = vmatpush.msra.mxu0 0.0
            %501 = vmatpush.msra.mxu0 0.0
            %502 = vmatpush.msra.mxu0 0.0
            %503 = vmatpush.msra.mxu0 0.0
            %504 = vmatpush.msra.mxu0 0.0
            %505 = vmatpush.msra.mxu0 0.0
            %506 = vmatpush.msra.mxu0 0.0
            %507 = vmatpush.msra.mxu0 0.0
            %508 = vmatpush.msra.mxu0 0.0
            %509 = vmatpush.msra.mxu0 0.0
            %510 = vmatpush.msra.mxu0 0.0
            %511 = vmatpush.msra.mxu0 %v494
            %512 = vmatmul.f32.gmra.mxu0 %v487
            %v513 = vpop.f32.mrf.mxu0
            %v514 = vadd.f32 %v478, %v513
            %515 = vmatmul.f32.gmra.mxu0 %v490
            %v516 = vpop.f32.mrf.mxu0
            %v517 = vadd.f32 %v483, %v516
            %518 = vdwg.mxu0
            %v519 = vsel %vm485, %v514, 0.0
            %520 = vadd.xlane.f32.xlu0 %v519
            %v521 = vpop.xlane.xlu0 %520
            %v522 = vsel %vm485, %v517, 0.0
            %523 = vadd.xlane.f32.xlu0 %v522
            %v524 = vpop.xlane.xlu0 %523
            %v525 = vxor.u32 %v521, 2147483648
            %v526 = vxor.u32 %v524, 2147483648
            %v527 = vmul.f32 %v525, 1.442695
            %v528 = vpow.pop %v527
            %v529 = vmul.f32 %v526, 1.442695
            %v530 = vpow.pop %v529
            %v531 = vadd.f32 %v528, 1.0
            %v532 = vadd.f32 %v530, 1.0
            %v533 = vrcp.pop %v531
            %v534 = vmul.f32 %v531, %v533
            %v535 = vsub.f32 1.0, %v534
            %v536 = vmul.f32 %v533, %v535
            %v537 = vadd.f32 %v533, %v536
            %vm538 = vweird.f32 %v531
            %vm539 = vweird.f32 %v533
            %vm540 = vmor %vm538, %vm539
            %v541 = vsel %vm540, %v533, %v537
            %v542 = vand.u32 2147483647, %v531
            %vm543 = vcmp.eq.f32.partialorder %v542, 8.507059e+37
            %v544 = vand.u32 %v531, 2147483648
            %v545 = vor.u32 1.1754944e-38, %v544
            %v546 = vsel %vm543, %v545, %v541
            %v547 = vmul.f32 1.0, %v546
            %v548 = vrcp.pop %v532
            %v549 = vmul.f32 %v532, %v548
            %v550 = vsub.f32 1.0, %v549
            %v551 = vmul.f32 %v548, %v550
            %v552 = vadd.f32 %v548, %v551
            %vm553 = vweird.f32 %v532
            %vm554 = vweird.f32 %v548
            %vm555 = vmor %vm553, %vm554
            %v556 = vsel %vm555, %v548, %v552
            %v557 = vand.u32 2147483647, %v532
            %vm558 = vcmp.eq.f32.partialorder %v557, 8.507059e+37
            %v559 = vand.u32 %v532, 2147483648
            %v560 = vor.u32 1.1754944e-38, %v559
            %v561 = vsel %vm558, %v560, %v556
            %v562 = vmul.f32 1.0, %v561
            %563 = vst.msk [vmem:[#allocation4] sm:$0xff] %vm436, %v547
            %564 = vst.msk [vmem:[#allocation4 + $0x8] sm:$0xff] %vm436, %v562
          $region132: #{cam_forward.1} parent=123 // pred_fallthru
            _
        $region124: #{cam_forward.1} parent=111 // pred_fallthru
          _
        %p565 = scmp.eq.s32.totalorder %s23, 1
        // Predicated region
        $region133: #{cam_forward.1} parent=111 // pred_check
          %p566 = pneg %p565
        $region134: #{cam_forward.1} parent=111 // pred_check_branch
          %568 = sbr.rel (%p566) target = $region136
        $region135: #{cam_forward.1} parent=111 // pred_region
          %v569 = vld [vmem:[%s357] sm:$0xff]
          %v570 = vld [vmem:[%s357 + $0x8] sm:$0xff]
          %v571 = vld [vmem:[#allocation4] sm:$0xff]
          %v572 = vld [vmem:[#allocation4 + $0x8] sm:$0xff]
          %574 = vset.pattern.permute.xlu0 0
          %575 = vperm.xlu0 %574, %v571
          %v576 = vpop.permute.xlu0 %575
          %579 = vset.pattern.permute.xlu0 0
          %580 = vperm.xlu0 %579, %v572
          %v581 = vpop.permute.xlu0 %580
          %v583 = vmul.f32 %v569, %v576
          %v584 = vmul.f32 %v570, %v581
          %585 = vst [vmem:[%s386] sm:$0xff] %v583
          %586 = vst [vmem:[%s386 + $0x8] sm:$0xff] %v584
        $region136: #{cam_forward.1} parent=111 // pred_fallthru
          _
        %s587 = sand.u32 %s196, 1
        %s588 = sand.u32 %s196, 1
        %s589 = smul.addr %s588, 16
        %s590 = scalar_lea.vmem [#allocation7], %s589
        // Predicated region
        $region137: #{cam_forward.1} parent=111 // pred_check
          %p591 = pneg %p206
        $region138: #{cam_forward.1} parent=111 // pred_check_branch
          %593 = sbr.rel (%p591) target = $region140
        $region139: #{cam_forward.1} parent=111 // pred_region
          %s594 = smul.u32 %s24, %s23
          %s595 = smul.addr %s22, 4
          %s596 = sadd.s32 %s594, %s595
          %s597 = smul.addr %s596, 8
          %s598 = scalar_lea.vmem %s6, %s597
          // Predicated region
          $region141: #{cam_forward.1} parent=139 // pred_check
            _
          $region142: #{cam_forward.1} parent=139 // pred_check_branch
            %600 = sbr.rel (0) target = $region144
          $region143: #{cam_forward.1} parent=139 // pred_region
            // Predicated region
            $region145: #{cam_forward.1} parent=143 // pred_check
              _
            $region146: #{cam_forward.1} parent=143 // pred_check_branch
              %602 = sbr.rel (0) target = $region148
            $region147: #{cam_forward.1} parent=143 // pred_region
              // Predicated region
              $region160: #{cam_forward.1} parent=147 // pred_check
                _
              $region161: #{cam_forward.1} parent=147 // pred_check_branch
                %620 = sbr.rel (0) target = $region163
              $region162: #{cam_forward.1} parent=147 // pred_region
                loop: start=0, step=1, limit=1
                $region164: #{cam_forward.1} parent=162 // loop_pre_header
                  _
                $region165: #{cam_forward.1} parent=162 // loop_header
                  %s622 = sphi 0, %s626
                  %p623 = scmp.ge.s32.totalorder %s622, 1
                  %s627 = sphi %s590, %s590
                  %s628 = sphi %s598, %s598
                $region166: #{cam_forward.1} parent=162 // loop_header_branch
                  %625 = sbr.rel (%p623) target = $region170
                $region167: #{cam_forward.1} parent=162 // loop_body
                  %v629 = vld [vmem:[%s627] sm:$0xff]
                  %630 = vst [vmem:[%s628] sm:$0xff] %v629
                  %v631 = vld [vmem:[%s627 + $0x8] sm:$0xff]
                  %632 = vst [vmem:[%s628 + $0x10] sm:$0xff] %v631
                $region168: #{cam_forward.1} parent=162 // loop_footer
                  %s626 = sadd.s32 1, %s622
                $region169: #{cam_forward.1} parent=162 // loop_footer_branch
                  %621 = sbr.rel target = $region165
                $region170: #{cam_forward.1} parent=162 // loop_exit
                  _
              $region163: #{cam_forward.1} parent=147 // pred_fallthru
                _
              // Predicated region
              $region171: #{cam_forward.1} parent=147 // pred_check
                _
              $region172: #{cam_forward.1} parent=147 // pred_check_branch
                %634 = sbr.rel target = $region174
              $region173: #{cam_forward.1} parent=147 // pred_region
                _
              $region174: #{cam_forward.1} parent=147 // pred_fallthru
                _
            $region148: #{cam_forward.1} parent=143 // pred_fallthru
              _
            // Predicated region
            $region149: #{cam_forward.1} parent=143 // pred_check
              _
            $region150: #{cam_forward.1} parent=143 // pred_check_branch
              %604 = sbr.rel target = $region152
            $region151: #{cam_forward.1} parent=143 // pred_region
              %s606 = ssub.s32 256, 1
              loop: start=0, step=1, limit=1
              $region153: #{cam_forward.1} parent=151 // loop_pre_header
                _
              $region154: #{cam_forward.1} parent=151 // loop_header
                %s608 = sphi 0, %s612
                %p609 = scmp.ge.s32.totalorder %s608, 1
                %s613 = sphi %s590, %s590
                %s614 = sphi %s598, %s598
              $region155: #{cam_forward.1} parent=151 // loop_header_branch
                %611 = sbr.rel (%p609) target = $region159
              $region156: #{cam_forward.1} parent=151 // loop_body
                %v615 = vld [vmem:[%s613] sm:%s606]
                %616 = vst [vmem:[%s614] sm:%s606] %v615
                %v617 = vld [vmem:[%s613 + $0x8] sm:%s606]
                %618 = vst [vmem:[%s614 + $0x10] sm:%s606] %v617
              $region157: #{cam_forward.1} parent=151 // loop_footer
                %s612 = sadd.s32 1, %s608
              $region158: #{cam_forward.1} parent=151 // loop_footer_branch
                %607 = sbr.rel target = $region154
              $region159: #{cam_forward.1} parent=151 // loop_exit
                _
            $region152: #{cam_forward.1} parent=143 // pred_fallthru
              _
          $region144: #{cam_forward.1} parent=139 // pred_fallthru
            _
          %635 = vnop
        $region140: #{cam_forward.1} parent=111 // pred_fallthru
          _
      $region112: #{cam_forward.1} parent=5 // pred_fallthru
        _
      %p636 = scmp.le.s32.totalorder 2, %s12
      // Predicated region
      $region175: #{cam_forward.1} parent=5 // pred_check
        %p637 = pneg %p636
      $region176: #{cam_forward.1} parent=5 // pred_check_branch
        %639 = sbr.rel (%p637) target = $region178
      $region177: #{cam_forward.1} parent=5 // pred_region
        %s640 = ssub.s32 %s12, 2
        // Predicated region
        $region179: #{cam_forward.1} parent=177 // pred_check
          %p641 = pneg %p212
        $region180: #{cam_forward.1} parent=177 // pred_check_branch
          %643 = sbr.rel (%p641) target = $region182
        $region181: #{cam_forward.1} parent=177 // pred_region
          %s644 = sand.u32 %s197, 1
          %s645 = sand.u32 %s197, 1
          %s646 = smul.addr %s645, 16
          %s647 = scalar_lea.vmem [#allocation7], %s646
        $region182: #{cam_forward.1} parent=177 // pred_fallthru
          _
      $region178: #{cam_forward.1} parent=5 // pred_fallthru
        _
    $region6: #{cam_forward.1} parent=1 // loop_footer
      %s16 = sadd.s32 1, %s12
    $region7: #{cam_forward.1} parent=1 // loop_footer_branch
      %11 = sbr.rel target = $region3
    $region8: #{cam_forward.1} parent=1 // loop_exit
      _

</llo_original>
